<compile_context>
chip_gen: v7x
topology: tpu7x:2x2x1
jax: 0.10.0
libtpu: 0.0.40
codegen_flags: <defaults>
</compile_context>

<pallas_src>
import functools

import jax
import jax.numpy as jnp
from jax import lax
from jax.experimental import pallas as pl
from jax.experimental.pallas import tpu as pltpu

LANES = 128
ROW_ALIGN = 32   # covers f32 (8,128), bf16 (16,128) and int8 (32,128) tiling


def _cdiv(a, b):
    return -(-a // b)


def _round_up(x, m):
    return ((x + m - 1) // m) * m


def _default_num_splits():
    """2-way grid split only pays off on chips with 2 TensorCores (v7x)."""
    try:
        kind = jax.devices()[0].device_kind.lower()
    except Exception:
        return 1
    return 2 if "v7" in kind else 1


def _normalize_labels(labels_left, labels_right):
    """Bring labels to a 4-byte dtype the kernel compares natively.

    int32 / uint32 / float32 inputs pass through untouched (zero HBM copies);
    narrower ints & bool widen to int32, half-precision floats widen to f32.
    Equality is preserved for all of these.
    """
    ll = jnp.asarray(labels_left)
    lr = jnp.asarray(labels_right)
    common = jnp.result_type(ll.dtype, lr.dtype)
    if jnp.issubdtype(common, jnp.floating):
        tgt = jnp.float32  # TODO(synk): float64 labels (x64 mode) may collide
    else:
        tgt = jnp.int32    # ints / bool; int64 labels (x64 mode) may wrap
    if ll.dtype != tgt:
        ll = ll.astype(tgt)
    if lr.dtype != tgt:
        lr = lr.astype(tgt)
    return ll, lr


def _contrastive_kernel(pdist_ref, ll_ref, lr_ref, out_ref, *,
                        margin, block_rows, n_blocks, row_limit):
    """One (block_rows, 128) tile of the lane-dense batch.

    grid = (num_splits [parallel], n_blocks [arbitrary / reduction]).
    out_ref: (1, 8, 128) f32 partial-sum block for the current split; it stays
    VMEM-resident across the reduction axis, so we accumulate into it directly
    (no scratch, no final copy).
    """
    i = pl.program_id(1)

    @pl.when(i == 0)
    def _():
        out_ref[...] = jnp.zeros_like(out_ref)

    p = pdist_ref[...].astype(jnp.float32)
    dissimilar = ll_ref[...] != lr_ref[...]
    # select-before-square; the global 0.5 is applied once in the wrapper.
    base = jnp.where(dissimilar, jnp.maximum(margin - p, 0.0), p)
    per_elem = base * base

    if row_limit is not None:
        # Ragged coverage: zero out rows past the real batch.  row_start uses
        # the UNclamped block index so blocks whose window was clamped by the
        # index_map (fully out-of-range splits) contribute exactly 0.
        c = pl.program_id(0)
        row_start = (c * n_blocks + i) * block_rows
        row_idx = lax.broadcasted_iota(jnp.int32, per_elem.shape, 0) + row_start
        per_elem = jnp.where(row_idx < row_limit, per_elem, 0.0)

    # Collapse the block to an (8,128) vreg-shaped partial: the reshape groups
    # rows exactly at (8,128) tile granularity (no relayout), and the axis-0
    # sum is pure cross-vreg VPU accumulation.
    out_ref[0] += per_elem.reshape(-1, 8, LANES).sum(axis=0)


def contrastive_loss(pdist, labels_left, labels_right, margin=2.0,
                     size_average=False, *, block_rows=4096, num_splits=None,
                     use_pallas=None):
    """Contrastive loss, semantics identical to the PyTorch Contrastive module.

    pdist:        (B,) float (any float dtype; kept native on HBM)
    labels_left:  (B,) any dtype
    labels_right: (B,) any dtype
    returns scalar float32 (sum over batch; mean if size_average=True)
    """
    assert pdist.shape[0] == labels_left.shape[0] == labels_right.shape[0]
    B = pdist.shape[0]
    margin = float(margin)

    ll, lr = _normalize_labels(labels_left, labels_right)

    if use_pallas is None:
        # Below ~1M elements the fused XLA elementwise+reduce is already at
        # roofline; the Pallas launch / per-step overhead would be a regression.
        use_pallas = B >= (1 << 20)

    rows_full = B // LANES
    tail = B - rows_full * LANES

    if (not use_pallas) or rows_full < ROW_ALIGN:
        p = pdist.astype(jnp.float32)
        base = jnp.where(ll != lr, jnp.maximum(margin - p, 0.0), p)
        loss = 0.5 * jnp.sum(base * base)
        return loss / B if size_average else loss

    if num_splits is None:
        num_splits = _default_num_splits()
    num_splits = max(1, int(num_splits))

    main = rows_full * LANES

    # --- lane-dense view, no padding ----------------------------------------
    # When tail == 0 the reshape below is a metadata-only bitcast (zero HBM
    # traffic).  When tail != 0 the prefix slice covers the 128-aligned part
    # and the <128-element remainder is summed with fused XLA below.
    if tail:
        pd_m, ll_m, lr_m = pdist[:main], ll[:main], lr[:main]
    else:
        pd_m, ll_m, lr_m = pdist, ll, lr
    pd2 = pd_m.reshape(rows_full, LANES)
    ll2 = ll_m.reshape(rows_full, LANES)
    lr2 = lr_m.reshape(rows_full, LANES)

    # --- block / grid selection ----------------------------------------------
    # block_rows=4096 -> 6 MiB/step (f32 pdist + 2x 4-byte labels), 12 MiB
    # double-buffered: fits v5e's 16 MiB default scoped VMEM and leaves plenty
    # of headroom on v6e/v7x.  Blocks never exceed the array's row extent so
    # only standard "partial tail block" DMAs occur.
    block_rows = max(ROW_ALIGN, (int(block_rows) // ROW_ALIGN) * ROW_ALIGN)
    per_split_rows = _round_up(_cdiv(rows_full, num_splits), ROW_ALIGN)
    max_rows = (rows_full // ROW_ALIGN) * ROW_ALIGN
    block_rows = min(block_rows, per_split_rows, max_rows)

    n_blocks = _cdiv(rows_full, num_splits * block_rows)
    exact = (num_splits * n_blocks * block_rows == rows_full)

    if exact:
        def in_map(c, i):
            return (c * n_blocks + i, 0)
        row_limit = None
    else:
        last_blk = (rows_full - 1) // block_rows
        def in_map(c, i):
            # Clamp so the DMA window never starts past the array; the kernel
            # masks such blocks (using the unclamped index) to contribute 0.
            return (jnp.minimum(c * n_blocks + i, last_blk), 0)
        row_limit = rows_full

    kernel = functools.partial(_contrastive_kernel, margin=margin,
                               block_rows=block_rows, n_blocks=n_blocks,
                               row_limit=row_limit)

    bytes_accessed = (main * (pd2.dtype.itemsize + ll2.dtype.itemsize
                              + lr2.dtype.itemsize)
                      + num_splits * 8 * LANES * 4)

    partials = pl.pallas_call(
        kernel,
        out_shape=jax.ShapeDtypeStruct((num_splits, 8, LANES), jnp.float32),
        grid_spec=pltpu.PrefetchScalarGridSpec(
            num_scalar_prefetch=0,
            grid=(num_splits, n_blocks),
            in_specs=[
                pl.BlockSpec((block_rows, LANES), in_map),
                pl.BlockSpec((block_rows, LANES), in_map),
                pl.BlockSpec((block_rows, LANES), in_map),
            ],
            out_specs=pl.BlockSpec((1, 8, LANES), lambda c, i: (c, 0, 0)),
        ),
        compiler_params=pltpu.CompilerParams(
            dimension_semantics=("parallel", "arbitrary")),
        cost_estimate=pl.CostEstimate(flops=6 * main, transcendentals=0,
                                      bytes_accessed=int(bytes_accessed)),
    )(pd2, ll2, lr2)

    loss = jnp.sum(partials)  # tiny (num_splits, 8, 128) reduce, fused by XLA

    if tail:
        pt = pdist[main:].astype(jnp.float32)
        bt = jnp.where(ll[main:] != lr[main:],
                       jnp.maximum(margin - pt, 0.0), pt)
        loss = loss + jnp.sum(bt * bt)

    loss = 0.5 * loss  # the per-element 0.5, hoisted out of the kernel
    return loss / B if size_average else loss


def _reference(pdist, ll, lr, margin=2.0, size_average=False):
    label = (ll != lr).astype(jnp.float32)
    p = pdist.astype(jnp.float32)
    loss = jnp.sum(
        (1.0 - label) * 0.5 * p ** 2
        + label * 0.5 * jnp.maximum(margin - p, 0.0) ** 2)
    return loss / pdist.shape[0] if size_average else loss


if __name__ == "__main__":
    key = jax.random.PRNGKey(0)
    k1, k2, k3, k4 = jax.random.split(key, 4)

    # Case 1: ragged B (rows not a multiple of block_rows -> in-kernel row
    # masking + partial last block; <128-elem tail via XLA).  f32 pdist,
    # int32 labels, sum reduction, Pallas forced so the kernel runs at small B.
    B = 40 * 128 + 3  # 5123
    pdist = jax.random.uniform(k1, (B,), dtype=jnp.float32) * 3.0
    ll = jax.random.randint(k2, (B,), 0, 4, dtype=jnp.int32)
    lr = jax.random.randint(k3, (B,), 0, 4, dtype=jnp.int32)

    out = contrastive_loss(pdist, ll, lr, margin=2.0, use_pallas=True)
    out = jax.block_until_ready(out)
    ref = _reference(pdist, ll, lr, margin=2.0)
    assert jnp.allclose(out, ref, rtol=1e-5, atol=1e-5), (out, ref)

    # Case 2: forced num_splits=2 -> exercises index-map clamping of the
    # fully-out-of-range split blocks on any chip generation.
    out2 = contrastive_loss(pdist, ll, lr, margin=2.0, use_pallas=True,
                            num_splits=2)
    out2 = jax.block_until_ready(out2)
    assert jnp.allclose(out2, ref, rtol=1e-5, atol=1e-5), (out2, ref)

    # Case 3: 128-aligned B (copy-free bitcast reshape, exact grid coverage ->
    # no masking code generated), bf16 pdist, float labels, mean reduction.
    B3 = 64 * 128  # 8192
    kk = jax.random.split(k4, 3)
    pdist_bf = (jax.random.uniform(kk[0], (B3,), dtype=jnp.float32) * 3.0
                ).astype(jnp.bfloat16)
    llf = (jax.random.randint(kk[1], (B3,), 0, 3) * 0.3).astype(jnp.float32)
    lrf = (jax.random.randint(kk[2], (B3,), 0, 3) * 0.3).astype(jnp.float32)
    out3 = contrastive_loss(pdist_bf, llf, lrf, margin=2.0, size_average=True,
                            use_pallas=True)
    out3 = jax.block_until_ready(out3)
    ref3 = _reference(pdist_bf, llf, lrf, margin=2.0, size_average=True)
    assert jnp.allclose(out3, ref3, rtol=1e-4, atol=1e-4), (out3, ref3)

    # Case 4: tiny batch takes the fused-XLA fallback.
    out4 = contrastive_loss(pdist[:8], ll[:8], lr[:8], margin=2.0)
    out4 = jax.block_until_ready(out4)
    ref4 = _reference(pdist[:8], ll[:8], lr[:8], margin=2.0)
    assert jnp.allclose(out4, ref4, rtol=1e-5, atol=1e-5), (out4, ref4)

    print("KERNEL_OK")
</pallas_src>

<mosaic_0001>
module attributes {stable_mosaic.version = 11 : i64} {
  func.func @_contrastive_kernel(%arg0: i32, %arg1: i32, %arg2: memref<32x128xf32, #tpu.memory_space<vmem>>, %arg3: memref<32x128xi32, #tpu.memory_space<vmem>>, %arg4: memref<32x128xi32, #tpu.memory_space<vmem>>, %arg5: memref<1x8x128xf32, #tpu.memory_space<vmem>>) attributes {dimension_semantics = [#tpu.dimension_semantics<parallel>, #tpu.dimension_semantics<arbitrary>], iteration_bounds = array<i64: 1, 2>, scalar_prefetch = 0 : i64, scratch_operands = 0 : i64, tpu.core_type = #tpu.core_type<tc>, window_params = [{transform_indices = @transform_0, window_bounds = array<i64: 32, 128>}, {transform_indices = @transform_1, window_bounds = array<i64: 32, 128>}, {transform_indices = @transform_2, window_bounds = array<i64: 32, 128>}, {transform_indices = @transform_3, window_bounds = array<i64: 1, 8, 128>}]} {
    %c0_i32 = arith.constant 0 : i32
    %0 = arith.cmpi eq, %arg1, %c0_i32 : i32
    %1 = arith.extui %0 : i1 to i32
    %c0_i32_0 = arith.constant 0 : i32
    %2 = arith.cmpi ne, %1, %c0_i32_0 : i32
    scf.if %2 {
      %cst_15 = arith.constant 0.000000e+00 : f32
      %31 = vector.broadcast %cst_15 : f32 to vector<1x8x128xf32>
      %c0_16 = arith.constant 0 : index
      %c0_17 = arith.constant 0 : index
      %c0_18 = arith.constant 0 : index
      %32 = vector.load %arg5[%c0_16, %c0_17, %c0_18] : memref<1x8x128xf32, #tpu.memory_space<vmem>>, vector<1x8x128xf32>
      tpu.vector_store %arg5[%c0_16, %c0_17, %c0_18], %31 {strides = array<i32>} : memref<1x8x128xf32, #tpu.memory_space<vmem>>, vector<1x8x128xf32>,
    } else {
    }
    %c0 = arith.constant 0 : index
    %c0_1 = arith.constant 0 : index
    %3 = vector.load %arg2[%c0, %c0_1] : memref<32x128xf32, #tpu.memory_space<vmem>>, vector<32x128xf32>
    %c0_2 = arith.constant 0 : index
    %c0_3 = arith.constant 0 : index
    %4 = vector.load %arg3[%c0_2, %c0_3] : memref<32x128xi32, #tpu.memory_space<vmem>>, vector<32x128xi32>
    %c0_4 = arith.constant 0 : index
    %c0_5 = arith.constant 0 : index
    %5 = vector.load %arg4[%c0_4, %c0_5] : memref<32x128xi32, #tpu.memory_space<vmem>>, vector<32x128xi32>
    %6 = arith.cmpi ne, %4, %5 : vector<32x128xi32>
    %cst = arith.constant 2.000000e+00 : f32
    %7 = vector.broadcast %cst : f32 to vector<32x128xf32>
    %8 = arith.subf %7, %3 : vector<32x128xf32>
    %cst_6 = arith.constant 0.000000e+00 : f32
    %9 = vector.broadcast %cst_6 : f32 to vector<32x128xf32>
    %10 = arith.maximumf %8, %9 : vector<32x128xf32>
    %11 = arith.select %6, %10, %3 : vector<32x128xi1>, vector<32x128xf32>
    %12 = arith.mulf %11, %11 : vector<32x128xf32>
    %c2_i32 = arith.constant 2 : i32
    %13 = arith.muli %arg0, %c2_i32 : i32
    %14 = arith.addi %13, %arg1 : i32
    %c32_i32 = arith.constant 32 : i32
    %15 = arith.muli %14, %c32_i32 : i32
    %16 = tpu.iota {dimensions = array<i32: 0>} : vector<32x128xi32>
    %17 = vector.broadcast %15 : i32 to vector<32x128xi32>
    %18 = arith.addi %16, %17 : vector<32x128xi32>
    %c40_i32 = arith.constant 40 : i32
    %19 = vector.broadcast %c40_i32 : i32 to vector<32x128xi32>
    %20 = arith.cmpi slt, %18, %19 : vector<32x128xi32>
    %cst_7 = arith.constant 0.000000e+00 : f32
    %21 = vector.broadcast %cst_7 : f32 to vector<32x128xf32>
    %22 = arith.select %20, %12, %21 : vector<32x128xi1>, vector<32x128xf32>
    %c0_8 = arith.constant 0 : index
    %c0_9 = arith.constant 0 : index
    %c0_10 = arith.constant 0 : index
    %23 = vector.load %arg5[%c0_8, %c0_9, %c0_10] : memref<1x8x128xf32, #tpu.memory_space<vmem>>, vector<1x8x128xf32>
    %24 = vector.shape_cast %23 : vector<1x8x128xf32> to vector<8x128xf32>
    %25 = vector.shape_cast %22 : vector<32x128xf32> to vector<4x8x128xf32>
    %cst_11 = arith.constant dense<0.000000e+00> : vector<8x128xf32>
    %26 = vector.multi_reduction <add>, %25, %cst_11 [0] : vector<4x8x128xf32> to vector<8x128xf32>
    %27 = arith.addf %24, %26 : vector<8x128xf32>
    %c0_12 = arith.constant 0 : index
    %c0_13 = arith.constant 0 : index
    %c0_14 = arith.constant 0 : index
    %28 = vector.load %arg5[%c0_12, %c0_13, %c0_14] : memref<1x8x128xf32, #tpu.memory_space<vmem>>, vector<1x8x128xf32>
    %29 = vector.shape_cast %28 : vector<1x8x128xf32> to vector<8x128xf32>
    %30 = vector.shape_cast %27 : vector<8x128xf32> to vector<1x8x128xf32>
    tpu.vector_store %arg5[%c0_12, %c0_13, %c0_14], %30 {strides = array<i32>} : memref<1x8x128xf32, #tpu.memory_space<vmem>>, vector<1x8x128xf32>,
    return
  }
  func.func @transform_0(%arg0: i32, %arg1: i32) -> (i32, i32) {
    %c2_i32 = arith.constant 2 : i32
    %0 = arith.muli %arg0, %c2_i32 : i32
    %1 = arith.addi %0, %arg1 : i32
    %c1_i32 = arith.constant 1 : i32
    %2 = arith.minsi %1, %c1_i32 : i32
    %c0_i32 = arith.constant 0 : i32
    %c0_i32_0 = arith.constant 0 : i32
    return %2, %c0_i32 : i32, i32
  }
  func.func @transform_1(%arg0: i32, %arg1: i32) -> (i32, i32) {
    %c2_i32 = arith.constant 2 : i32
    %0 = arith.muli %arg0, %c2_i32 : i32
    %1 = arith.addi %0, %arg1 : i32
    %c1_i32 = arith.constant 1 : i32
    %2 = arith.minsi %1, %c1_i32 : i32
    %c0_i32 = arith.constant 0 : i32
    %c0_i32_0 = arith.constant 0 : i32
    return %2, %c0_i32 : i32, i32
  }
  func.func @transform_2(%arg0: i32, %arg1: i32) -> (i32, i32) {
    %c2_i32 = arith.constant 2 : i32
    %0 = arith.muli %arg0, %c2_i32 : i32
    %1 = arith.addi %0, %arg1 : i32
    %c1_i32 = arith.constant 1 : i32
    %2 = arith.minsi %1, %c1_i32 : i32
    %c0_i32 = arith.constant 0 : i32
    %c0_i32_0 = arith.constant 0 : i32
    return %2, %c0_i32 : i32, i32
  }
  func.func @transform_3(%arg0: i32, %arg1: i32) -> (i32, i32, i32) {
    %c0_i32 = arith.constant 0 : i32
    %c0_i32_0 = arith.constant 0 : i32
    %c0_i32_1 = arith.constant 0 : i32
    return %arg0, %c0_i32, %c0_i32_0 : i32, i32, i32
  }
}

</mosaic_0001>

<llo_original>
// kernel: tpu_custom_call.1
$region0: #{tpu_custom_call.1}
  #allocation0 [shape = 'u32[]', space=smem, size = 0x4, offset = 0x4, fixed_abs, tag = 'smem constant byte address 0x4 - core index']
  #allocation1 [shape = 'u32[144,128]{1,0:T(1,128)}', space=vmem, size = 0x12000, scoped, tag = 'internal scratch']
  %s0 = inlined_call_operand.hbm [shape: f32[40,128], index: 0, kind: input, shape index: {}]
  %s1 = inlined_call_operand.hbm [shape: s32[40,128], index: 1, kind: input, shape index: {}]
  %s2 = inlined_call_operand.hbm [shape: s32[40,128], index: 2, kind: input, shape index: {}]
  %s3 = inlined_call_operand.hbm [shape: f32[1,8,128], index: 3, kind: output, shape index: {}]
  %s4 = sld [smem:[#allocation0]]
  $region61: #{tpu_custom_call.1} parent=0
    _
  %s6 = ssub.s32 1, %s4
  %s7 = scalar_select 0, %s6, %s4
  $region1: #{tpu_custom_call.1} parent=0
    #allocation2 [shape = 'u8[32768]{0}', space=vmem, size = 0x8000, scoped, tag = 'input window, operand 0']
    #allocation3 [shape = 's32[2]{0}', space=sflag, size = 0x8, scoped, tag = 'scoped memory for tpu_custom_call.1']
    #allocation4 [shape = 's32[2]{0}', space=sflag, size = 0x8, scoped, tag = 'scoped memory for tpu_custom_call.1']
    #allocation5 [shape = 'u8[32768]{0}', space=vmem, size = 0x8000, scoped, tag = 'input window, operand 1']
    #allocation6 [shape = 's32[2]{0}', space=sflag, size = 0x8, scoped, tag = 'scoped memory for tpu_custom_call.1']
    #allocation7 [shape = 'u8[32768]{0}', space=vmem, size = 0x8000, scoped, tag = 'input window, operand 2']
    #allocation8 [shape = 'u8[4096]{0}', space=vmem, size = 0x1000, scoped, tag = 'output window, operand 0, single buffered']
    %8 = vsyncpa [#allocation3], 0
    %s9 = scalar_lea.sflag [#allocation3], 1
    %10 = vsyncpa %s9, 0
    %11 = vsyncpa [#allocation6], 0
    %s12 = scalar_lea.sflag [#allocation6], 1
    %13 = vsyncpa %s12, 0
    %14 = vsyncpa [#allocation4], 0
    loop: start=0, step=1, limit=4
    $region2: #{tpu_custom_call.1} parent=1 // loop_pre_header
      _
    $region3: #{tpu_custom_call.1} parent=1 // loop_header
      %s16 = sphi 0, %s20
      %p17 = scmp.ge.s32.totalorder %s16, 4
      %s23 = sphi 0, %s35
      %s24 = sphi 0, %s31
      %s25 = sphi 0, %s23
      %s26 = sphi 0, %s24
      %s27 = sphi 0, %s25
      %s28 = sphi 0, %s26
      %s46 = sphi 0, %s48
      %s49 = sphi 0, %s46
      %s50 = sphi 0, %s49
      %s66 = sphi 0, %s50
      %s80 = sphi 0, %s82
      %s83 = sphi 0, %s80
      %s84 = sphi 0, %s83
      %s100 = sphi 0, %s84
      %s114 = sphi 0, %s116
      %s117 = sphi 0, %s114
      %s118 = sphi 0, %s117
      %s134 = sphi 0, %s118
      %s140 = sphi 0, %s142
      %s143 = sphi 0, %s140
      %s144 = sphi 0, %s143
      %s160 = sphi 0, %s144
    $region4: #{tpu_custom_call.1} parent=1 // loop_header_branch
      %19 = sbr.rel (%p17) target = $region8
    $region5: #{tpu_custom_call.1} parent=1 // loop_body
      %s21 = ssub.s32 %s16, 1
      %s22 = ssub.s32 %s16, 2
      %s29 = sadd.s32 1, %s24
      %p30 = scmp.ge.s32.totalorder %s29, 2
      %s31 = scalar_select %p30, 0, %s29
      %s32 = sadd.s32 1, %s23
      %s33 = scalar_select %p30, %s32, %s23
      %p34 = scmp.ge.s32.totalorder %s33, 1
      %s35 = scalar_select %p34, 0, %s33
      %s36 = smul.u32 %s23, 2
      %s37 = sadd.s32 %s36, %s24
      %p38 = scmp.lt.s32.totalorder %s37, 1
      %s39 = scalar_select %p38, %s37, 1
      %s40 = smul.u32 %s35, 2
      %s41 = sadd.s32 %s40, %s31
      %p42 = scmp.lt.s32.totalorder %s41, 1
      %s43 = scalar_select %p42, %s41, 1
      %s44 = ssub.s32 %s39, %s43
      %p45 = scmp.eq.s32.totalorder %s44, 0
      %s47 = sadd.s32 %s46, 1
      %s48 = scalar_select %p45, %s46, %s47
      %p51 = pneg %p45
      %p52 = scmp.eq.s32.totalorder %s16, 1
      %p53 = por %p51, %p52
      %p54 = scmp.ne.s32.totalorder %s46, %s49
      %p55 = scmp.eq.s32.totalorder %s16, 0
      %p56 = por %p54, %p55
      %p57 = scmp.ne.s32.totalorder %s46, %s49
      %p58 = scmp.eq.s32.totalorder %s21, 1
      %p59 = por %p57, %p58
      %p60 = scmp.ne.s32.totalorder %s49, %s50
      %p61 = scmp.eq.s32.totalorder %s21, 0
      %p62 = por %p60, %p61
      %p63 = scmp.ne.s32.totalorder %s49, %s50
      %p64 = scmp.eq.s32.totalorder %s22, 1
      %p65 = por %p63, %p64
      %p67 = scmp.ne.s32.totalorder %s50, %s66
      %p68 = scmp.eq.s32.totalorder %s22, 0
      %p69 = por %p67, %p68
      %s70 = smul.u32 %s23, 2
      %s71 = sadd.s32 %s70, %s24
      %p72 = scmp.lt.s32.totalorder %s71, 1
      %s73 = scalar_select %p72, %s71, 1
      %s74 = smul.u32 %s35, 2
      %s75 = sadd.s32 %s74, %s31
      %p76 = scmp.lt.s32.totalorder %s75, 1
      %s77 = scalar_select %p76, %s75, 1
      %s78 = ssub.s32 %s73, %s77
      %p79 = scmp.eq.s32.totalorder %s78, 0
      %s81 = sadd.s32 %s80, 1
      %s82 = scalar_select %p79, %s80, %s81
      %p85 = pneg %p79
      %p86 = scmp.eq.s32.totalorder %s16, 1
      %p87 = por %p85, %p86
      %p88 = scmp.ne.s32.totalorder %s80, %s83
      %p89 = scmp.eq.s32.totalorder %s16, 0
      %p90 = por %p88, %p89
      %p91 = scmp.ne.s32.totalorder %s80, %s83
      %p92 = scmp.eq.s32.totalorder %s21, 1
      %p93 = por %p91, %p92
      %p94 = scmp.ne.s32.totalorder %s83, %s84
      %p95 = scmp.eq.s32.totalorder %s21, 0
      %p96 = por %p94, %p95
      %p97 = scmp.ne.s32.totalorder %s83, %s84
      %p98 = scmp.eq.s32.totalorder %s22, 1
      %p99 = por %p97, %p98
      %p101 = scmp.ne.s32.totalorder %s84, %s100
      %p102 = scmp.eq.s32.totalorder %s22, 0
      %p103 = por %p101, %p102
      %s104 = smul.u32 %s23, 2
      %s105 = sadd.s32 %s104, %s24
      %p106 = scmp.lt.s32.totalorder %s105, 1
      %s107 = scalar_select %p106, %s105, 1
      %s108 = smul.u32 %s35, 2
      %s109 = sadd.s32 %s108, %s31
      %p110 = scmp.lt.s32.totalorder %s109, 1
      %s111 = scalar_select %p110, %s109, 1
      %s112 = ssub.s32 %s107, %s111
      %p113 = scmp.eq.s32.totalorder %s112, 0
      %s115 = sadd.s32 %s114, 1
      %s116 = scalar_select %p113, %s114, %s115
      %p119 = pneg %p113
      %p120 = scmp.eq.s32.totalorder %s16, 1
      %p121 = por %p119, %p120
      %p122 = scmp.ne.s32.totalorder %s114, %s117
      %p123 = scmp.eq.s32.totalorder %s16, 0
      %p124 = por %p122, %p123
      %p125 = scmp.ne.s32.totalorder %s114, %s117
      %p126 = scmp.eq.s32.totalorder %s21, 1
      %p127 = por %p125, %p126
      %p128 = scmp.ne.s32.totalorder %s117, %s118
      %p129 = scmp.eq.s32.totalorder %s21, 0
      %p130 = por %p128, %p129
      %p131 = scmp.ne.s32.totalorder %s117, %s118
      %p132 = scmp.eq.s32.totalorder %s22, 1
      %p133 = por %p131, %p132
      %p135 = scmp.ne.s32.totalorder %s118, %s134
      %p136 = scmp.eq.s32.totalorder %s22, 0
      %p137 = por %p135, %p136
      %s138 = ssub.s32 %s23, %s35
      %p139 = scmp.eq.s32.totalorder %s138, 0
      %s141 = sadd.s32 %s140, 1
      %s142 = scalar_select %p139, %s140, %s141
      %p145 = pneg %p139
      %p146 = scmp.eq.s32.totalorder %s16, 1
      %p147 = por %p145, %p146
      %p148 = scmp.ne.s32.totalorder %s140, %s143
      %p149 = scmp.eq.s32.totalorder %s16, 0
      %p150 = por %p148, %p149
      %p151 = scmp.ne.s32.totalorder %s140, %s143
      %p152 = scmp.eq.s32.totalorder %s21, 1
      %p153 = por %p151, %p152
      %p154 = scmp.ne.s32.totalorder %s143, %s144
      %p155 = scmp.eq.s32.totalorder %s21, 0
      %p156 = por %p154, %p155
      %p157 = scmp.ne.s32.totalorder %s143, %s144
      %p158 = scmp.eq.s32.totalorder %s22, 1
      %p159 = por %p157, %p158
      %p161 = scmp.ne.s32.totalorder %s144, %s160
      %p162 = scmp.eq.s32.totalorder %s22, 0
      %p163 = por %p161, %p162
      %p164 = scmp.le.s32.totalorder 1, %s16
      %p165 = scmp.lt.s32.totalorder %s16, 3
      %p166 = pnand %p164, %p165
      %p167 = pneg %p166
      // Predicated region
      $region9: #{tpu_custom_call.1} parent=5 // pred_check
        _
      $region10: #{tpu_custom_call.1} parent=5 // pred_check_branch
        %169 = sbr.rel (%p166) target = $region12
      $region11: #{tpu_custom_call.1} parent=5 // pred_region
        %s170 = ssub.s32 %s16, 1
      $region12: #{tpu_custom_call.1} parent=5 // pred_fallthru
        _
      %p171 = scmp.lt.s32.totalorder %s16, 2
      // Predicated region
      $region13: #{tpu_custom_call.1} parent=5 // pred_check
        %p172 = pneg %p171
      $region14: #{tpu_custom_call.1} parent=5 // pred_check_branch
        %174 = sbr.rel (%p172) target = $region16
      $region15: #{tpu_custom_call.1} parent=5 // pred_region
        // Predicated region
        $region17: #{tpu_custom_call.1} parent=15 // pred_check
          %p175 = pneg %p56
        $region18: #{tpu_custom_call.1} parent=15 // pred_check_branch
          %177 = sbr.rel (%p175) target = $region20
        $region19: #{tpu_custom_call.1} parent=15 // pred_region
          %s178 = sand.u32 %s46, 1
          %s179 = scalar_lea.sflag [#allocation3], %s178
          %s180 = sand.u32 %s46, 1
          %s181 = smul.addr %s180, 32
          %s182 = scalar_lea.vmem [#allocation2], %s181
          %s183 = smul.u32 %s23, 2
          %s184 = sadd.s32 %s183, %s24
          %p185 = scmp.lt.s32.totalorder %s184, 1
          %s186 = scalar_select %p185, %s184, 1
          %s187 = smul.u32 4, %s186
          %s188 = ssub.s32 5, %s187
          %p189 = scmp.lt.s32.totalorder %s188, 4
          %s190 = scalar_select %p189, %s188, 4
          %s191 = smul.u32 128, %s190
          %s193 = ssub.s32 512, %s191
          %194 = vsyncadd %s179, %s193
          %p195 = scmp.ne.s32.totalorder 0, %s191
          %s196 = smul.addr %s187, 128
          %s197 = scalar_lea.hbm %s0, %s196
          %s198 = smul.u32 8, %s190
          %s199 = sshll.u32 %s182, 4
          %s200 = int_to_ptr.vmem [resolvable:$true] %s199
          %s201 = sshll.u32 %s198, 4
          %205 = dma.hbm_to_vmem [thread:$0]  (%p195), %s197, %s201, %s200, %s179, 128, 128, 8
        $region20: #{tpu_custom_call.1} parent=15 // pred_fallthru
          _
        // Predicated region
        $region21: #{tpu_custom_call.1} parent=15 // pred_check
          %p206 = pneg %p90
        $region22: #{tpu_custom_call.1} parent=15 // pred_check_branch
          %208 = sbr.rel (%p206) target = $region24
        $region23: #{tpu_custom_call.1} parent=15 // pred_region
          %s209 = sand.u32 %s16, 1
          %s210 = scalar_lea.sflag [#allocation6], %s209
          %s211 = sand.u32 %s80, 1
          %s212 = smul.addr %s211, 32
          %s213 = scalar_lea.vmem [#allocation5], %s212
          %s214 = smul.u32 %s23, 2
          %s215 = sadd.s32 %s214, %s24
          %p216 = scmp.lt.s32.totalorder %s215, 1
          %s217 = scalar_select %p216, %s215, 1
          %s218 = smul.u32 4, %s217
          %s219 = ssub.s32 5, %s218
          %p220 = scmp.lt.s32.totalorder %s219, 4
          %s221 = scalar_select %p220, %s219, 4
          %s222 = smul.u32 128, %s221
          %s224 = ssub.s32 512, %s222
          %225 = vsyncadd %s210, %s224
          %p226 = scmp.ne.s32.totalorder 0, %s222
          %s227 = smul.addr %s218, 128
          %s228 = scalar_lea.hbm %s1, %s227
          %s229 = smul.u32 8, %s221
          %s230 = sshll.u32 %s213, 4
          %s231 = int_to_ptr.vmem [resolvable:$true] %s230
          %s232 = sshll.u32 %s229, 4
          %236 = dma.hbm_to_vmem [thread:$0]  (%p226), %s228, %s232, %s231, %s210, 128, 128, 8
        $region24: #{tpu_custom_call.1} parent=15 // pred_fallthru
          _
        // Predicated region
        $region25: #{tpu_custom_call.1} parent=15 // pred_check
          %p237 = pneg %p124
        $region26: #{tpu_custom_call.1} parent=15 // pred_check_branch
          %239 = sbr.rel (%p237) target = $region28
        $region27: #{tpu_custom_call.1} parent=15 // pred_region
          %s240 = sand.u32 %s16, 1
          %s241 = scalar_lea.sflag [#allocation6], %s240
          %s242 = sand.u32 %s114, 1
          %s243 = smul.addr %s242, 32
          %s244 = scalar_lea.vmem [#allocation7], %s243
          %s245 = smul.u32 %s23, 2
          %s246 = sadd.s32 %s245, %s24
          %p247 = scmp.lt.s32.totalorder %s246, 1
          %s248 = scalar_select %p247, %s246, 1
          %s249 = smul.u32 4, %s248
          %s250 = ssub.s32 5, %s249
          %p251 = scmp.lt.s32.totalorder %s250, 4
          %s252 = scalar_select %p251, %s250, 4
          %s253 = smul.u32 128, %s252
          %s255 = ssub.s32 512, %s253
          %256 = vsyncadd %s241, %s255
          %p257 = scmp.ne.s32.totalorder 0, %s253
          %s258 = smul.addr %s249, 128
          %s259 = scalar_lea.hbm %s2, %s258
          %s260 = smul.u32 8, %s252
          %s261 = sshll.u32 %s244, 4
          %s262 = int_to_ptr.vmem [resolvable:$true] %s261
          %s263 = sshll.u32 %s260, 4
          %267 = dma.hbm_to_vmem [thread:$0]  (%p257), %s259, %s263, %s262, %s241, 128, 128, 8
        $region28: #{tpu_custom_call.1} parent=15 // pred_fallthru
          _
      $region16: #{tpu_custom_call.1} parent=5 // pred_fallthru
        _
      %p268 = scmp.le.s32.totalorder 1, %s16
      %p269 = scmp.lt.s32.totalorder %s16, 3
      %p270 = pnand %p268, %p269
      %p271 = pneg %p270
      // Predicated region
      $region29: #{tpu_custom_call.1} parent=5 // pred_check
        _
      $region30: #{tpu_custom_call.1} parent=5 // pred_check_branch
        %273 = sbr.rel (%p270) target = $region32
      $region31: #{tpu_custom_call.1} parent=5 // pred_region
        %s274 = ssub.s32 %s16, 1
        %s275 = sand.u32 %s49, 1
        %s276 = scalar_lea.sflag [#allocation3], %s275
        %s277 = sand.u32 %s49, 1
        %s278 = smul.addr %s277, 32
        %s279 = scalar_lea.vmem [#allocation2], %s278
        // Predicated region
        $region33: #{tpu_custom_call.1} parent=31 // pred_check
          %p280 = pneg %p62
        $region34: #{tpu_custom_call.1} parent=31 // pred_check_branch
          %282 = sbr.rel (%p280) target = $region36
        $region35: #{tpu_custom_call.1} parent=31 // pred_region
          %283 = dma.done %s276, 512
        $region36: #{tpu_custom_call.1} parent=31 // pred_fallthru
          _
        %s284 = sand.u32 %s21, 1
        %s285 = scalar_lea.sflag [#allocation6], %s284
        %s286 = sand.u32 %s83, 1
        %s287 = smul.addr %s286, 32
        %s288 = scalar_lea.vmem [#allocation5], %s287
        // Predicated region
        $region37: #{tpu_custom_call.1} parent=31 // pred_check
          %p289 = pneg %p96
        $region38: #{tpu_custom_call.1} parent=31 // pred_check_branch
          %291 = sbr.rel (%p289) target = $region40
        $region39: #{tpu_custom_call.1} parent=31 // pred_region
          %292 = dma.done %s285, 512
        $region40: #{tpu_custom_call.1} parent=31 // pred_fallthru
          _
        %s293 = sand.u32 %s21, 1
        %s294 = scalar_lea.sflag [#allocation6], %s293
        %s295 = sand.u32 %s117, 1
        %s296 = smul.addr %s295, 32
        %s297 = scalar_lea.vmem [#allocation7], %s296
        // Predicated region
        $region41: #{tpu_custom_call.1} parent=31 // pred_check
          %p298 = pneg %p130
        $region42: #{tpu_custom_call.1} parent=31 // pred_check_branch
          %300 = sbr.rel (%p298) target = $region44
        $region43: #{tpu_custom_call.1} parent=31 // pred_region
          %301 = dma.done %s294, 512
        $region44: #{tpu_custom_call.1} parent=31 // pred_fallthru
          _
        %s302 = sand.u32 %s49, 1
        %s303 = scalar_lea.sflag [#allocation3], %s302
        %s304 = sand.u32 %s49, 1
        %s305 = smul.addr %s304, 32
        %s306 = scalar_lea.vmem [#allocation2], %s305
        %p307 = pneg %p62
        %p308 = pneg %p59
        %s309 = sand.u32 %s21, 1
        %s310 = scalar_lea.sflag [#allocation6], %s309
        %s311 = sand.u32 %s83, 1
        %s312 = smul.addr %s311, 32
        %s313 = scalar_lea.vmem [#allocation5], %s312
        %p314 = pneg %p96
        %p315 = pneg %p93
        %s316 = sand.u32 %s21, 1
        %s317 = scalar_lea.sflag [#allocation6], %s316
        %s318 = sand.u32 %s117, 1
        %s319 = smul.addr %s318, 32
        %s320 = scalar_lea.vmem [#allocation7], %s319
        %p321 = pneg %p130
        %p322 = pneg %p127
        %p323 = pneg %p156
        %p324 = pneg %p153
        %s325 = smul.u32 %s25, 2
        %s326 = sadd.s32 %s325, %s26
        %p327 = scmp.lt.s32.totalorder %s326, 1
        %s328 = scalar_select %p327, %s326, 1
        %s329 = smul.u32 4, %s328
        %s330 = ssub.s32 5, %s329
        %p331 = scmp.lt.s32.totalorder %s330, 4
        %s332 = scalar_select %p331, %s330, 4
        %s333 = smul.u32 128, %s332
        %s334 = smul.u32 %s25, 2
        %s335 = sadd.s32 %s334, %s26
        %p336 = scmp.lt.s32.totalorder %s335, 1
        %s337 = scalar_select %p336, %s335, 1
        %s338 = smul.u32 4, %s337
        %s339 = ssub.s32 5, %s338
        %p340 = scmp.lt.s32.totalorder %s339, 4
        %s341 = scalar_select %p340, %s339, 4
        %s342 = smul.u32 128, %s341
        %s343 = smul.u32 %s25, 2
        %s344 = sadd.s32 %s343, %s26
        %p345 = scmp.lt.s32.totalorder %s344, 1
        %s346 = scalar_select %p345, %s344, 1
        %s347 = smul.u32 4, %s346
        %s348 = ssub.s32 5, %s347
        %p349 = scmp.lt.s32.totalorder %s348, 4
        %s350 = scalar_select %p349, %s348, 4
        %s351 = smul.u32 128, %s350
        %p352 = scmp.eq.s32.totalorder %s26, 0
        // Predicated region
        $region45: #{tpu_custom_call.1} parent=31 // pred_check
          %p353 = pneg %p352
        $region46: #{tpu_custom_call.1} parent=31 // pred_check_branch
          %355 = sbr.rel (%p353) target = $region48
        $region47: #{tpu_custom_call.1} parent=31 // pred_region
          %356 = vst [vmem:[#allocation8] sm:$0xff] 0.0
        $region48: #{tpu_custom_call.1} parent=31 // pred_fallthru
          _
        %v357 = vld [vmem:[%s279] sm:$0xff]
        %v358 = vld [vmem:[%s279 + $0x8] sm:$0xff]
        %v359 = vld [vmem:[%s279 + $0x10] sm:$0xff]
        %v360 = vld [vmem:[%s279 + $0x18] sm:$0xff]
        %v361 = vld [vmem:[%s288] sm:$0xff]
        %v362 = vld [vmem:[%s288 + $0x8] sm:$0xff]
        %v363 = vld [vmem:[%s288 + $0x10] sm:$0xff]
        %v364 = vld [vmem:[%s288 + $0x18] sm:$0xff]
        %v365 = vld [vmem:[%s297] sm:$0xff]
        %v366 = vld [vmem:[%s297 + $0x8] sm:$0xff]
        %v367 = vld [vmem:[%s297 + $0x10] sm:$0xff]
        %v368 = vld [vmem:[%s297 + $0x18] sm:$0xff]
        %vm369 = vcmp.ne.s32.totalorder %v361, %v365
        %vm370 = vcmp.ne.s32.totalorder %v362, %v366
        %vm371 = vcmp.ne.s32.totalorder %v363, %v367
        %vm372 = vcmp.ne.s32.totalorder %v364, %v368
        %v373 = vsub.f32 2.0, %v357
        %v374 = vsub.f32 2.0, %v358
        %v375 = vsub.f32 2.0, %v359
        %v376 = vsub.f32 2.0, %v360
        %v377 = vmax.f32 %v373, 0.0
        %v378 = vmax.f32 %v374, 0.0
        %v379 = vmax.f32 %v375, 0.0
        %v380 = vmax.f32 %v376, 0.0
        %v381 = vsel %vm369, %v377, %v357
        %v382 = vsel %vm370, %v378, %v358
        %v383 = vsel %vm371, %v379, %v359
        %v384 = vsel %vm372, %v380, %v360
        %v385 = vmul.f32 %v381, %v381
        %v386 = vmul.f32 %v382, %v382
        %v387 = vmul.f32 %v383, %v383
        %v388 = vmul.f32 %v384, %v384
        %s389 = smul.u32 %s25, 2
        %s390 = sadd.s32 %s389, %s26
        %s391 = smul.u32 %s390, 32
        %v392 = vlaneseq
        %v393 = vshrl.u32 %v392, 7
        %v394 = vadd.s32 %v393, 8
        %v395 = vadd.s32 %v393, 16
        %v396 = vadd.s32 %v393, 24
        %v397 = vstv %s391
        %v398 = vadd.s32 %v393, %v397
        %v399 = vadd.s32 %v394, %v397
        %v400 = vadd.s32 %v395, %v397
        %v401 = vadd.s32 %v396, %v397
        %vm402 = vcmp.lt.s32.totalorder %v398, 40
        %vm403 = vcmp.lt.s32.totalorder %v399, 40
        %vm404 = vcmp.lt.s32.totalorder %v400, 40
        %vm405 = vcmp.lt.s32.totalorder %v401, 40
        %v406 = vsel %vm402, %v385, 0.0
        %v407 = vsel %vm403, %v386, 0.0
        %v408 = vsel %vm404, %v387, 0.0
        %v409 = vsel %vm405, %v388, 0.0
        %v410 = vld [vmem:[#allocation8] sm:$0xff]
        %v411 = vadd.f32 %v406, %v407
        %v412 = vadd.f32 %v411, %v408
        %v413 = vadd.f32 %v412, %v409
        %v414 = vadd.f32 %v410, %v413
        %415 = vst [vmem:[#allocation8] sm:$0xff] %v414
        // Predicated region
        $region49: #{tpu_custom_call.1} parent=31 // pred_check
          %p416 = pneg %p153
        $region50: #{tpu_custom_call.1} parent=31 // pred_check_branch
          %418 = sbr.rel (%p416) target = $region52
        $region51: #{tpu_custom_call.1} parent=31 // pred_region
          %s420 = ssub.s32 128, 128
          %421 = vsyncadd [#allocation4], %s420
          %s422 = smul.addr %s25, 128
          %s423 = scalar_lea.hbm %s3, %s422
          %s425 = sshll.u32 [#allocation8], 4
          %s426 = int_to_ptr.vmem [resolvable:$true] %s425
          %428 = dma.vmem_to_hbm [thread:$0]  %s426, 128, %s423, [#allocation4]
        $region52: #{tpu_custom_call.1} parent=31 // pred_fallthru
          _
        // Predicated region
        $region53: #{tpu_custom_call.1} parent=31 // pred_check
          %p429 = pneg %p153
        $region54: #{tpu_custom_call.1} parent=31 // pred_check_branch
          %431 = sbr.rel (%p429) target = $region56
        $region55: #{tpu_custom_call.1} parent=31 // pred_region
          %432 = dma.done [#allocation4], 128
        $region56: #{tpu_custom_call.1} parent=31 // pred_fallthru
          _
      $region32: #{tpu_custom_call.1} parent=5 // pred_fallthru
        _
      %p433 = scmp.le.s32.totalorder 2, %s16
      // Predicated region
      $region57: #{tpu_custom_call.1} parent=5 // pred_check
        %p434 = pneg %p433
      $region58: #{tpu_custom_call.1} parent=5 // pred_check_branch
        %436 = sbr.rel (%p434) target = $region60
      $region59: #{tpu_custom_call.1} parent=5 // pred_region
        %s437 = ssub.s32 %s16, 2
      $region60: #{tpu_custom_call.1} parent=5 // pred_fallthru
        _
    $region6: #{tpu_custom_call.1} parent=1 // loop_footer
      %s20 = sadd.s32 1, %s16
    $region7: #{tpu_custom_call.1} parent=1 // loop_footer_branch
      %15 = sbr.rel target = $region3
    $region8: #{tpu_custom_call.1} parent=1 // loop_exit
      _
    %438 = vsyncpa [#allocation3], 1
    %s439 = scalar_lea.sflag [#allocation3], 1
    %440 = vsyncpa %s439, 1
    %441 = vsyncpa [#allocation6], 1
    %s442 = scalar_lea.sflag [#allocation6], 1
    %443 = vsyncpa %s442, 1
    %444 = vsyncpa [#allocation4], 1
    %s445 = scalar_lea.sflag [#allocation4], 1
    %446 = vsyncpa %s445, 1

</llo_original>
